<compile_context>
chip_gen: v7x
topology: tpu7x:2x2x1
jax: 0.10.0
libtpu: 0.0.40
codegen_flags: <defaults>
</compile_context>

<pallas_src>
import jax
import jax.numpy as jnp
from jax.experimental import pallas as pl
from jax.experimental.pallas import tpu as pltpu


def _round_up(x: int, m: int) -> int:
    return (x + m - 1) // m * m


def actor_kernel(params_ref, state_ref, w1_ref, w2_ref, w3_ref, out_ref):
    state_dim = state_ref.shape[1]
    h1_dim = w1_ref.shape[1]
    h2_dim = w2_ref.shape[1]
    out_pad = out_ref.shape[1]

    # Packed parameter rows (single small VMEM block, resident across the grid).
    avg = params_ref[0:1, 0:state_dim]
    inv_std = params_ref[1:2, 0:state_dim]
    b1 = params_ref[2:3, 0:h1_dim]
    b2 = params_ref[3:4, 0:h2_dim]
    b3 = params_ref[4:5, 0:out_pad]

    # State normalization: multiply by precomputed reciprocal (no VPU divide).
    x = (state_ref[...] - avg) * inv_std

    # Hidden layer 1: MXU matmul + bias + ReLU.
    h = jnp.dot(x, w1_ref[...], preferred_element_type=jnp.float32) + b1
    h = jnp.maximum(h, 0.0)

    # Hidden layer 2.
    h = jnp.dot(h, w2_ref[...], preferred_element_type=jnp.float32) + b2
    h = jnp.maximum(h, 0.0)

    # Output layer (zero-padded to a lane-dense width) + tanh squash (EUP).
    a = jnp.dot(h, w3_ref[...], preferred_element_type=jnp.float32) + b3
    out_ref[...] = jnp.tanh(a)


@jax.jit
def actor_forward(state, state_avg, state_std, w1, b1, w2, b2, w3, b3):
    batch, state_dim = state.shape
    h1_dim = w1.shape[1]
    h2_dim = w2.shape[1]
    action_dim = w3.shape[1]

    # Lane-dense output width and packed-parameter lane width.
    out_pad = _round_up(action_dim, 128)
    p_lane = _round_up(max(state_dim, h1_dim, h2_dim, out_pad), 128)

    # Batch tile: multiple of 8 sublanes, capped at 512 rows (tiny VMEM footprint
    # even double-buffered -> safely within v7x's 64 MiB, streams at roofline).
    max_tb = 512
    tb = max_tb if batch > max_tb else max(_round_up(batch, 8), 8)
    padded_batch = _round_up(batch, tb)

    def _pad_row(v, lane):
        v = jnp.asarray(v, jnp.float32).reshape(1, -1)
        return jnp.pad(v, ((0, 0), (0, lane - v.shape[1])))

    # Exact reciprocal computed once outside the kernel (keeps 1e-5 tolerance).
    inv_std = 1.0 / jnp.asarray(state_std, jnp.float32)

    # Pack the five tiny row-parameters into one (8, p_lane) block -> one DMA.
    params = jnp.concatenate(
        [
            _pad_row(state_avg, p_lane),
            _pad_row(inv_std, p_lane),
            _pad_row(b1, p_lane),
            _pad_row(b2, p_lane),
            _pad_row(b3, p_lane),
            jnp.zeros((3, p_lane), jnp.float32),  # pad rows to a sublane multiple of 8
        ],
        axis=0,
    )

    # Zero-pad last-layer weights to the lane-dense output width.
    w3_p = jnp.pad(jnp.asarray(w3, jnp.float32), ((0, 0), (0, out_pad - action_dim)))

    # Zero-pad batch to a multiple of the tile.
    state_p = jnp.pad(jnp.asarray(state, jnp.float32),
                      ((0, padded_batch - batch), (0, 0)))

    out = pl.pallas_call(
        actor_kernel,
        out_shape=jax.ShapeDtypeStruct((padded_batch, out_pad), jnp.float32),
        grid=(padded_batch // tb,),
        in_specs=[
            pl.BlockSpec((8, p_lane), lambda i: (0, 0)),          # packed params (resident)
            pl.BlockSpec((tb, state_dim), lambda i: (i, 0)),      # streamed state tile
            pl.BlockSpec((state_dim, h1_dim), lambda i: (0, 0)),  # w1 (resident)
            pl.BlockSpec((h1_dim, h2_dim), lambda i: (0, 0)),     # w2 (resident)
            pl.BlockSpec((h2_dim, out_pad), lambda i: (0, 0)),    # w3 padded (resident)
        ],
        out_specs=pl.BlockSpec((tb, out_pad), lambda i: (i, 0)),  # lane-dense output tile
        compiler_params=pltpu.CompilerParams(
            dimension_semantics=("parallel",),  # shard batch tiles across TCs on v7x
        ),
    )(params, state_p, jnp.asarray(w1, jnp.float32), jnp.asarray(w2, jnp.float32), w3_p)

    return out[:batch, :action_dim]


def orthogonal_init(key, shape, gain):
    # Deterministic orthogonal init (mimics th.nn.init.orthogonal_).
    rows, cols = shape
    n = max(rows, cols)
    a = jax.random.normal(key, (n, n), dtype=jnp.float32)
    q, r = jnp.linalg.qr(a)
    q = q * jnp.sign(jnp.diag(r))  # sign-fix for a unique decomposition
    return gain * q[:rows, :cols]


def _reference(state, state_avg, state_std, w1, b1, w2, b2, w3, b3):
    x = (state - state_avg.reshape(1, -1)) / state_std.reshape(1, -1)
    h = jnp.maximum(x @ w1 + b1.reshape(1, -1), 0.0)
    h = jnp.maximum(h @ w2 + b2.reshape(1, -1), 0.0)
    return jnp.tanh(h @ w3 + b3.reshape(1, -1))


if __name__ == "__main__":
    # Actor(net_dims=[32, 32], state_dim=16, action_dim=8)
    batch, state_dim, action_dim = 2, 16, 8
    net_dims = [32, 32]

    key = jax.random.PRNGKey(0)
    k_state, k_w1, k_w2, k_w3, k_big = jax.random.split(key, 5)

    state = jax.random.normal(k_state, (batch, state_dim), dtype=jnp.float32)

    # Running state normalization stats (non-trainable params in the module).
    state_avg = jnp.zeros((state_dim,), dtype=jnp.float32)
    state_std = jnp.ones((state_dim,), dtype=jnp.float32)

    # build_mlp([state_dim, 32, 32, action_dim]) -> Linear/ReLU/Linear/ReLU/Linear
    # PyTorch Linear weight is (out, in); we store the transpose (in, out).
    w1 = jax.random.normal(k_w1, (state_dim, net_dims[0]), dtype=jnp.float32) * 0.1
    b1 = jnp.zeros((net_dims[0],), dtype=jnp.float32)
    w2 = jax.random.normal(k_w2, (net_dims[0], net_dims[1]), dtype=jnp.float32) * 0.1
    b2 = jnp.zeros((net_dims[1],), dtype=jnp.float32)
    # Last layer: orthogonal init with std=0.5, bias = 1e-6 (layer_init_with_orthogonal).
    w3 = orthogonal_init(k_w3, (action_dim, net_dims[1]), gain=0.5).T  # stored as (in, out)
    b3 = jnp.full((action_dim,), 1e-6, dtype=jnp.float32)

    params = (state_avg, state_std, w1, b1, w2, b2, w3, b3)

    # Small-batch run (single grid step).
    out = actor_forward(state, *params)
    out = jax.block_until_ready(out)
    ref = _reference(state, *params)
    assert out.shape == (batch, action_dim)
    assert jnp.allclose(out, ref, atol=1e-5, rtol=1e-5)

    # Larger batch to exercise the multi-tile grid + batch padding path.
    big_batch = 1000
    state_big = jax.random.normal(k_big, (big_batch, state_dim), dtype=jnp.float32)
    out_big = jax.block_until_ready(actor_forward(state_big, *params))
    ref_big = _reference(state_big, *params)
    assert out_big.shape == (big_batch, action_dim)
    assert jnp.allclose(out_big, ref_big, atol=1e-5, rtol=1e-5)

    print("KERNEL_OK")
</pallas_src>

<mosaic_0001>
module attributes {stable_mosaic.version = 11 : i64} {
  func.func @actor_kernel(%arg0: i32, %arg1: memref<8x128xf32, #tpu.memory_space<vmem>>, %arg2: memref<8x16xf32, #tpu.memory_space<vmem>>, %arg3: memref<16x32xf32, #tpu.memory_space<vmem>>, %arg4: memref<32x32xf32, #tpu.memory_space<vmem>>, %arg5: memref<32x128xf32, #tpu.memory_space<vmem>>, %arg6: memref<8x128xf32, #tpu.memory_space<vmem>>) attributes {dimension_semantics = [#tpu.dimension_semantics<parallel>], iteration_bounds = array<i64: 1>, scalar_prefetch = 0 : i64, scratch_operands = 0 : i64, tpu.core_type = #tpu.core_type<tc>, window_params = [{pipeline_mode = #tpu.pipeline_mode<synchronous>, transform_indices = @transform_0, window_bounds = array<i64: 8, 128>}, {transform_indices = @transform_1, window_bounds = array<i64: 8, 16>}, {pipeline_mode = #tpu.pipeline_mode<synchronous>, transform_indices = @transform_2, window_bounds = array<i64: 16, 32>}, {pipeline_mode = #tpu.pipeline_mode<synchronous>, transform_indices = @transform_3, window_bounds = array<i64: 32, 32>}, {pipeline_mode = #tpu.pipeline_mode<synchronous>, transform_indices = @transform_4, window_bounds = array<i64: 32, 128>}, {transform_indices = @transform_5, window_bounds = array<i64: 8, 128>}]} {
    %c0 = arith.constant 0 : index
    %c0_0 = arith.constant 0 : index
    %0 = vector.load %arg1[%c0, %c0_0] : memref<8x128xf32, #tpu.memory_space<vmem>>, vector<1x16xf32>
    %c1 = arith.constant 1 : index
    %c0_1 = arith.constant 0 : index
    %1 = vector.load %arg1[%c1, %c0_1] : memref<8x128xf32, #tpu.memory_space<vmem>>, vector<1x16xf32>
    %c2 = arith.constant 2 : index
    %c0_2 = arith.constant 0 : index
    %2 = vector.load %arg1[%c2, %c0_2] : memref<8x128xf32, #tpu.memory_space<vmem>>, vector<1x32xf32>
    %c3 = arith.constant 3 : index
    %c0_3 = arith.constant 0 : index
    %3 = vector.load %arg1[%c3, %c0_3] : memref<8x128xf32, #tpu.memory_space<vmem>>, vector<1x32xf32>
    %c4 = arith.constant 4 : index
    %c0_4 = arith.constant 0 : index
    %4 = vector.load %arg1[%c4, %c0_4] : memref<8x128xf32, #tpu.memory_space<vmem>>, vector<1x128xf32>
    %c0_5 = arith.constant 0 : index
    %c0_6 = arith.constant 0 : index
    %5 = vector.load %arg2[%c0_5, %c0_6] : memref<8x16xf32, #tpu.memory_space<vmem>>, vector<8x16xf32>
    %6 = vector.broadcast %0 : vector<1x16xf32> to vector<8x16xf32>
    %7 = arith.subf %5, %6 : vector<8x16xf32>
    %8 = vector.broadcast %1 : vector<1x16xf32> to vector<8x16xf32>
    %9 = arith.mulf %7, %8 : vector<8x16xf32>
    %c0_7 = arith.constant 0 : index
    %c0_8 = arith.constant 0 : index
    %10 = vector.load %arg3[%c0_7, %c0_8] : memref<16x32xf32, #tpu.memory_space<vmem>>, vector<16x32xf32>
    %cst = arith.constant dense<0.000000e+00> : vector<8x32xf32>
    %11 = tpu.matmul %9, %10, %cst {dimension_numbers = #tpu.dot_dimension_numbers<[1], [0], [0], [1], [0, 0, 1, 1], [], []>} : vector<8x16xf32>, vector<16x32xf32>, vector<8x32xf32> -> vector<8x32xf32>
    %12 = vector.broadcast %2 : vector<1x32xf32> to vector<8x32xf32>
    %13 = arith.addf %11, %12 : vector<8x32xf32>
    %cst_9 = arith.constant 0.000000e+00 : f32
    %14 = vector.broadcast %cst_9 : f32 to vector<8x32xf32>
    %15 = arith.maximumf %13, %14 : vector<8x32xf32>
    %c0_10 = arith.constant 0 : index
    %c0_11 = arith.constant 0 : index
    %16 = vector.load %arg4[%c0_10, %c0_11] : memref<32x32xf32, #tpu.memory_space<vmem>>, vector<32x32xf32>
    %cst_12 = arith.constant dense<0.000000e+00> : vector<8x32xf32>
    %17 = tpu.matmul %15, %16, %cst_12 {dimension_numbers = #tpu.dot_dimension_numbers<[1], [0], [0], [1], [0, 0, 1, 1], [], []>} : vector<8x32xf32>, vector<32x32xf32>, vector<8x32xf32> -> vector<8x32xf32>
    %18 = vector.broadcast %3 : vector<1x32xf32> to vector<8x32xf32>
    %19 = arith.addf %17, %18 : vector<8x32xf32>
    %cst_13 = arith.constant 0.000000e+00 : f32
    %20 = vector.broadcast %cst_13 : f32 to vector<8x32xf32>
    %21 = arith.maximumf %19, %20 : vector<8x32xf32>
    %c0_14 = arith.constant 0 : index
    %c0_15 = arith.constant 0 : index
    %22 = vector.load %arg5[%c0_14, %c0_15] : memref<32x128xf32, #tpu.memory_space<vmem>>, vector<32x128xf32>
    %cst_16 = arith.constant dense<0.000000e+00> : vector<8x128xf32>
    %23 = tpu.matmul %21, %22, %cst_16 {dimension_numbers = #tpu.dot_dimension_numbers<[1], [0], [0], [1], [0, 0, 1, 1], [], []>} : vector<8x32xf32>, vector<32x128xf32>, vector<8x128xf32> -> vector<8x128xf32>
    %24 = vector.broadcast %4 : vector<1x128xf32> to vector<8x128xf32>
    %25 = arith.addf %23, %24 : vector<8x128xf32>
    %26 = math.tanh %25 : vector<8x128xf32>
    %c0_17 = arith.constant 0 : index
    %c0_18 = arith.constant 0 : index
    %27 = vector.load %arg6[%c0_17, %c0_18] : memref<8x128xf32, #tpu.memory_space<vmem>>, vector<8x128xf32>
    tpu.vector_store %arg6[%c0_17, %c0_18], %26 {strides = array<i32>} : memref<8x128xf32, #tpu.memory_space<vmem>>, vector<8x128xf32>,
    return
  }
  func.func @transform_0(%arg0: i32) -> (i32, i32) {
    %c0_i32 = arith.constant 0 : i32
    %c0_i32_0 = arith.constant 0 : i32
    %c0_i32_1 = arith.constant 0 : i32
    return %c0_i32, %c0_i32_0 : i32, i32
  }
  func.func @transform_1(%arg0: i32) -> (i32, i32) {
    %c0_i32 = arith.constant 0 : i32
    %c0_i32_0 = arith.constant 0 : i32
    return %arg0, %c0_i32 : i32, i32
  }
  func.func @transform_2(%arg0: i32) -> (i32, i32) {
    %c0_i32 = arith.constant 0 : i32
    %c0_i32_0 = arith.constant 0 : i32
    %c0_i32_1 = arith.constant 0 : i32
    return %c0_i32, %c0_i32_0 : i32, i32
  }
  func.func @transform_3(%arg0: i32) -> (i32, i32) {
    %c0_i32 = arith.constant 0 : i32
    %c0_i32_0 = arith.constant 0 : i32
    %c0_i32_1 = arith.constant 0 : i32
    return %c0_i32, %c0_i32_0 : i32, i32
  }
  func.func @transform_4(%arg0: i32) -> (i32, i32) {
    %c0_i32 = arith.constant 0 : i32
    %c0_i32_0 = arith.constant 0 : i32
    %c0_i32_1 = arith.constant 0 : i32
    return %c0_i32, %c0_i32_0 : i32, i32
  }
  func.func @transform_5(%arg0: i32) -> (i32, i32) {
    %c0_i32 = arith.constant 0 : i32
    %c0_i32_0 = arith.constant 0 : i32
    return %arg0, %c0_i32 : i32, i32
  }
}

</mosaic_0001>

<llo_original>
// kernel: actor_forward.1
$region0: #{actor_forward.1}
  #allocation0 [shape = 'u32[]', space=smem, size = 0x4, offset = 0x4, fixed_abs, tag = 'smem constant byte address 0x4 - core index']
  #allocation1 [shape = 'u32[144,128]{1,0:T(1,128)}', space=vmem, size = 0x12000, scoped, tag = 'internal scratch']
  %s0 = inlined_call_operand.vmem [shape: f32[8,128], index: 0, kind: input, shape index: {}]
  %s1 = inlined_call_operand.vmem [shape: f32[8,16], index: 1, kind: input, shape index: {}]
  %s2 = inlined_call_operand.vmem [shape: f32[16,32], index: 2, kind: input, shape index: {}]
  %s3 = inlined_call_operand.vmem [shape: f32[32,32], index: 3, kind: input, shape index: {}]
  %s4 = inlined_call_operand.vmem [shape: f32[32,128], index: 4, kind: input, shape index: {}]
  %s5 = inlined_call_operand.vmem [shape: f32[8,128], index: 5, kind: output, shape index: {}]
  %s6 = sld [smem:[#allocation0]]
  $region30: #{actor_forward.1} parent=0
    _
  %s8 = ssub.s32 1, %s6
  %s9 = scalar_select 0, %s8, %s6
  // Predicated region
  $region2: #{actor_forward.1} parent=0 // pred_check
    _
  $region3: #{actor_forward.1} parent=0 // pred_check_branch
    %11 = sbr.rel (0) target = $region5
  $region4: #{actor_forward.1} parent=0 // pred_region
    _
  $region5: #{actor_forward.1} parent=0 // pred_fallthru
    _
  // Predicated region
  $region6: #{actor_forward.1} parent=0 // pred_check
    _
  $region7: #{actor_forward.1} parent=0 // pred_check_branch
    %13 = sbr.rel (0) target = $region9
  $region8: #{actor_forward.1} parent=0 // pred_region
    _
  $region9: #{actor_forward.1} parent=0 // pred_fallthru
    _
  // Predicated region
  $region10: #{actor_forward.1} parent=0 // pred_check
    _
  $region11: #{actor_forward.1} parent=0 // pred_check_branch
    %15 = sbr.rel (0) target = $region13
  $region12: #{actor_forward.1} parent=0 // pred_region
    _
  $region13: #{actor_forward.1} parent=0 // pred_fallthru
    _
  // Predicated region
  $region14: #{actor_forward.1} parent=0 // pred_check
    _
  $region15: #{actor_forward.1} parent=0 // pred_check_branch
    %17 = sbr.rel (0) target = $region17
  $region16: #{actor_forward.1} parent=0 // pred_region
    _
  $region17: #{actor_forward.1} parent=0 // pred_fallthru
    _
  // Predicated region
  $region18: #{actor_forward.1} parent=0 // pred_check
    _
  $region19: #{actor_forward.1} parent=0 // pred_check_branch
    %19 = sbr.rel (0) target = $region21
  $region20: #{actor_forward.1} parent=0 // pred_region
    _
  $region21: #{actor_forward.1} parent=0 // pred_fallthru
    _
  %v20 = vld [vmem:[%s0] sm:$0x1]
  %v21 = vld [vmem:[%s0 + $0x1] sm:$0x1]
  %v22 = vld [vmem:[%s0 + $0x2] sm:$0x1]
  %v23 = vld [vmem:[%s0 + $0x3] sm:$0x1]
  %v24 = vld [vmem:[%s0 + $0x4] sm:$0x1]
  %v25 = vld [vmem:[%s1] sm:$0xff]
  %v26 = vlaneseq
  %v27 = vshrl.u32 %v26, 7
  %v28 = vsub.s32 0, %v27
  %v29 = vrot.slane %v20, %v28
  %v30 = vsub.f32 %v25, %v29
  %v31 = vlaneseq
  %v32 = vshrl.u32 %v31, 7
  %v33 = vsub.s32 0, %v32
  %v34 = vrot.slane %v21, %v33
  %v35 = vmul.f32 %v30, %v34
  %v36 = vld [vmem:[%s2] sm:$0xff]
  %v37 = vld [vmem:[%s2 + $0x8] sm:$0xff]
  %v38 = vlaneseq
  %v39 = vshrl.u32 %v38, 7
  %v40 = vsub.s32 0, %v39
  %v41 = vrot.slane %v22, %v40
  %vm42 = vcmask 130048
  %v44 = vsel %vm42, %v35, 0
  %46 = vmatprep.subr.mxu0 0.0
  %47 = vmatpush1.msra.mxu0 %v36
  %48 = vmatprep.subr.mxu0 0.0
  %49 = vmatpush1.msra.mxu0 %v37
  %50 = vmatprep.subr.mxu0 0.0
  %51 = vmatpush1.msra.mxu0 0.0
  %52 = vmatprep.subr.mxu0 0.0
  %53 = vmatpush1.msra.mxu0 0.0
  %54 = vmatprep.subr.mxu0 0.0
  %55 = vmatpush1.msra.mxu0 0.0
  %56 = vmatprep.subr.mxu0 0.0
  %57 = vmatpush1.msra.mxu0 0.0
  %58 = vmatprep.subr.mxu0 0.0
  %59 = vmatpush1.msra.mxu0 0.0
  %60 = vmatprep.subr.mxu0 0.0
  %61 = vmatpush1.msra.mxu0 0.0
  %62 = vmatprep.subr.mxu0 0.0
  %63 = vmatpush1.msra.mxu0 0.0
  %64 = vmatprep.subr.mxu0 0.0
  %65 = vmatpush1.msra.mxu0 0.0
  %66 = vmatprep.subr.mxu0 0.0
  %67 = vmatpush1.msra.mxu0 0.0
  %68 = vmatprep.subr.mxu0 0.0
  %69 = vmatpush1.msra.mxu0 0.0
  %70 = vmatprep.subr.mxu0 0.0
  %71 = vmatpush1.msra.mxu0 0.0
  %72 = vmatprep.subr.mxu0 0.0
  %73 = vmatpush1.msra.mxu0 0.0
  %74 = vmatprep.subr.mxu0 0.0
  %75 = vmatpush1.msra.mxu0 0.0
  %76 = vmatprep.subr.mxu0 0.0
  %77 = vmatpush1.msra.mxu0 0.0
  %78 = vmatprep.subr.mxu0 0.0
  %79 = vmatpush1.msra.mxu0 0.0
  %80 = vmatprep.subr.mxu0 0.0
  %81 = vmatpush1.msra.mxu0 0.0
  %82 = vmatprep.subr.mxu0 0.0
  %83 = vmatpush1.msra.mxu0 0.0
  %84 = vmatprep.subr.mxu0 0.0
  %85 = vmatpush1.msra.mxu0 0.0
  %86 = vmatprep.subr.mxu0 0.0
  %87 = vmatpush1.msra.mxu0 0.0
  %88 = vmatprep.subr.mxu0 0.0
  %89 = vmatpush1.msra.mxu0 0.0
  %90 = vmatprep.subr.mxu0 0.0
  %91 = vmatpush1.msra.mxu0 0.0
  %92 = vmatprep.subr.mxu0 0.0
  %93 = vmatpush1.msra.mxu0 0.0
  %94 = vmatprep.subr.mxu0 0.0
  %95 = vmatpush1.msra.mxu0 0.0
  %96 = vmatprep.subr.mxu0 0.0
  %97 = vmatpush1.msra.mxu0 0.0
  %98 = vmatprep.subr.mxu0 0.0
  %99 = vmatpush1.msra.mxu0 0.0
  %100 = vmatprep.subr.mxu0 0.0
  %101 = vmatpush1.msra.mxu0 0.0
  %102 = vmatprep.subr.mxu0 0.0
  %103 = vmatpush1.msra.mxu0 0.0
  %104 = vmatprep.subr.mxu0 0.0
  %105 = vmatpush1.msra.mxu0 0.0
  %106 = vmatprep.subr.mxu0 0.0
  %107 = vmatpush1.msra.mxu0 0.0
  %108 = vmatprep.subr.mxu0 0.0
  %109 = vmatpush1.msra.mxu0 0.0
  %110 = vmatprep.mubr.f32.mxu0 0.0
  %111 = vmatmul.mubr.f32.gmra.mrb[0].mxu0 %v44
  %v112 = vpop.f32.mrb[0].mxu0
  %v113 = vadd.f32 %v41, %v112
  %v114 = vpop.f32.mrb[0].mxu0
  %115 = vdwg.mxu0
  %v116 = vmax.f32 %v113, 0.0
  %v117 = vld [vmem:[%s3] sm:$0xff]
  %v118 = vld [vmem:[%s3 + $0x8] sm:$0xff]
  %v119 = vld [vmem:[%s3 + $0x10] sm:$0xff]
  %v120 = vld [vmem:[%s3 + $0x18] sm:$0xff]
  %v121 = vlaneseq
  %v122 = vshrl.u32 %v121, 7
  %v123 = vsub.s32 0, %v122
  %v124 = vrot.slane %v23, %v123
  %vm125 = vcmask 261120
  %v127 = vsel %vm125, %v116, 0
  %129 = vmatprep.subr.mxu0 0.0
  %130 = vmatpush1.msra.mxu0 %v117
  %131 = vmatprep.subr.mxu0 0.0
  %132 = vmatpush1.msra.mxu0 %v118
  %133 = vmatprep.subr.mxu0 0.0
  %134 = vmatpush1.msra.mxu0 %v119
  %135 = vmatprep.subr.mxu0 0.0
  %136 = vmatpush1.msra.mxu0 %v120
  %137 = vmatprep.subr.mxu0 0.0
  %138 = vmatpush1.msra.mxu0 0.0
  %139 = vmatprep.subr.mxu0 0.0
  %140 = vmatpush1.msra.mxu0 0.0
  %141 = vmatprep.subr.mxu0 0.0
  %142 = vmatpush1.msra.mxu0 0.0
  %143 = vmatprep.subr.mxu0 0.0
  %144 = vmatpush1.msra.mxu0 0.0
  %145 = vmatprep.subr.mxu0 0.0
  %146 = vmatpush1.msra.mxu0 0.0
  %147 = vmatprep.subr.mxu0 0.0
  %148 = vmatpush1.msra.mxu0 0.0
  %149 = vmatprep.subr.mxu0 0.0
  %150 = vmatpush1.msra.mxu0 0.0
  %151 = vmatprep.subr.mxu0 0.0
  %152 = vmatpush1.msra.mxu0 0.0
  %153 = vmatprep.subr.mxu0 0.0
  %154 = vmatpush1.msra.mxu0 0.0
  %155 = vmatprep.subr.mxu0 0.0
  %156 = vmatpush1.msra.mxu0 0.0
  %157 = vmatprep.subr.mxu0 0.0
  %158 = vmatpush1.msra.mxu0 0.0
  %159 = vmatprep.subr.mxu0 0.0
  %160 = vmatpush1.msra.mxu0 0.0
  %161 = vmatprep.subr.mxu0 0.0
  %162 = vmatpush1.msra.mxu0 0.0
  %163 = vmatprep.subr.mxu0 0.0
  %164 = vmatpush1.msra.mxu0 0.0
  %165 = vmatprep.subr.mxu0 0.0
  %166 = vmatpush1.msra.mxu0 0.0
  %167 = vmatprep.subr.mxu0 0.0
  %168 = vmatpush1.msra.mxu0 0.0
  %169 = vmatprep.subr.mxu0 0.0
  %170 = vmatpush1.msra.mxu0 0.0
  %171 = vmatprep.subr.mxu0 0.0
  %172 = vmatpush1.msra.mxu0 0.0
  %173 = vmatprep.subr.mxu0 0.0
  %174 = vmatpush1.msra.mxu0 0.0
  %175 = vmatprep.subr.mxu0 0.0
  %176 = vmatpush1.msra.mxu0 0.0
  %177 = vmatprep.subr.mxu0 0.0
  %178 = vmatpush1.msra.mxu0 0.0
  %179 = vmatprep.subr.mxu0 0.0
  %180 = vmatpush1.msra.mxu0 0.0
  %181 = vmatprep.subr.mxu0 0.0
  %182 = vmatpush1.msra.mxu0 0.0
  %183 = vmatprep.subr.mxu0 0.0
  %184 = vmatpush1.msra.mxu0 0.0
  %185 = vmatprep.subr.mxu0 0.0
  %186 = vmatpush1.msra.mxu0 0.0
  %187 = vmatprep.subr.mxu0 0.0
  %188 = vmatpush1.msra.mxu0 0.0
  %189 = vmatprep.subr.mxu0 0.0
  %190 = vmatpush1.msra.mxu0 0.0
  %191 = vmatprep.subr.mxu0 0.0
  %192 = vmatpush1.msra.mxu0 0.0
  %193 = vmatprep.mubr.f32.mxu0 0.0
  %194 = vmatmul.mubr.f32.gmra.mrb[0].mxu0 %v127
  %v195 = vpop.f32.mrb[0].mxu0
  %v196 = vadd.f32 %v124, %v195
  %v197 = vpop.f32.mrb[0].mxu0
  %198 = vdwg.mxu0
  %v199 = vmax.f32 %v196, 0.0
  %v200 = vld [vmem:[%s4] sm:$0xff]
  %v201 = vld [vmem:[%s4 + $0x8] sm:$0xff]
  %v202 = vld [vmem:[%s4 + $0x10] sm:$0xff]
  %v203 = vld [vmem:[%s4 + $0x18] sm:$0xff]
  %v204 = vlaneseq
  %v205 = vshrl.u32 %v204, 7
  %v206 = vsub.s32 0, %v205
  %v207 = vrot.slane %v24, %v206
  %v209 = vsel %vm125, %v199, 0
  %211 = vmatprep.subr.mxu0 0.0
  %212 = vmatpush1.msra.mxu0 %v200
  %213 = vmatprep.subr.mxu0 0.0
  %214 = vmatpush1.msra.mxu0 %v201
  %215 = vmatprep.subr.mxu0 0.0
  %216 = vmatpush1.msra.mxu0 %v202
  %217 = vmatprep.subr.mxu0 0.0
  %218 = vmatpush1.msra.mxu0 %v203
  %219 = vmatprep.subr.mxu0 0.0
  %220 = vmatpush1.msra.mxu0 0.0
  %221 = vmatprep.subr.mxu0 0.0
  %222 = vmatpush1.msra.mxu0 0.0
  %223 = vmatprep.subr.mxu0 0.0
  %224 = vmatpush1.msra.mxu0 0.0
  %225 = vmatprep.subr.mxu0 0.0
  %226 = vmatpush1.msra.mxu0 0.0
  %227 = vmatprep.subr.mxu0 0.0
  %228 = vmatpush1.msra.mxu0 0.0
  %229 = vmatprep.subr.mxu0 0.0
  %230 = vmatpush1.msra.mxu0 0.0
  %231 = vmatprep.subr.mxu0 0.0
  %232 = vmatpush1.msra.mxu0 0.0
  %233 = vmatprep.subr.mxu0 0.0
  %234 = vmatpush1.msra.mxu0 0.0
  %235 = vmatprep.subr.mxu0 0.0
  %236 = vmatpush1.msra.mxu0 0.0
  %237 = vmatprep.subr.mxu0 0.0
  %238 = vmatpush1.msra.mxu0 0.0
  %239 = vmatprep.subr.mxu0 0.0
  %240 = vmatpush1.msra.mxu0 0.0
  %241 = vmatprep.subr.mxu0 0.0
  %242 = vmatpush1.msra.mxu0 0.0
  %243 = vmatprep.subr.mxu0 0.0
  %244 = vmatpush1.msra.mxu0 0.0
  %245 = vmatprep.subr.mxu0 0.0
  %246 = vmatpush1.msra.mxu0 0.0
  %247 = vmatprep.subr.mxu0 0.0
  %248 = vmatpush1.msra.mxu0 0.0
  %249 = vmatprep.subr.mxu0 0.0
  %250 = vmatpush1.msra.mxu0 0.0
  %251 = vmatprep.subr.mxu0 0.0
  %252 = vmatpush1.msra.mxu0 0.0
  %253 = vmatprep.subr.mxu0 0.0
  %254 = vmatpush1.msra.mxu0 0.0
  %255 = vmatprep.subr.mxu0 0.0
  %256 = vmatpush1.msra.mxu0 0.0
  %257 = vmatprep.subr.mxu0 0.0
  %258 = vmatpush1.msra.mxu0 0.0
  %259 = vmatprep.subr.mxu0 0.0
  %260 = vmatpush1.msra.mxu0 0.0
  %261 = vmatprep.subr.mxu0 0.0
  %262 = vmatpush1.msra.mxu0 0.0
  %263 = vmatprep.subr.mxu0 0.0
  %264 = vmatpush1.msra.mxu0 0.0
  %265 = vmatprep.subr.mxu0 0.0
  %266 = vmatpush1.msra.mxu0 0.0
  %267 = vmatprep.subr.mxu0 0.0
  %268 = vmatpush1.msra.mxu0 0.0
  %269 = vmatprep.subr.mxu0 0.0
  %270 = vmatpush1.msra.mxu0 0.0
  %271 = vmatprep.subr.mxu0 0.0
  %272 = vmatpush1.msra.mxu0 0.0
  %273 = vmatprep.subr.mxu0 0.0
  %274 = vmatpush1.msra.mxu0 0.0
  %275 = vmatprep.mubr.f32.mxu0 0.0
  %276 = vmatmul.mubr.f32.gmra.mrb[0].mxu0 %v209
  %v277 = vpop.f32.mrb[0].mxu0
  %v278 = vadd.f32 %v207, %v277
  %v279 = vpop.f32.mrb[0].mxu0
  %280 = vdwg.mxu0
  %v281 = vtanh.pop %v278
  %282 = vst [vmem:[%s5] sm:$0xff] %v281
  // Predicated region
  $region22: #{actor_forward.1} parent=0 // pred_check
    _
  $region23: #{actor_forward.1} parent=0 // pred_check_branch
    %284 = sbr.rel (0) target = $region25
  $region24: #{actor_forward.1} parent=0 // pred_region
    _
  $region25: #{actor_forward.1} parent=0 // pred_fallthru
    _
  // Predicated region
  $region26: #{actor_forward.1} parent=0 // pred_check
    _
  $region27: #{actor_forward.1} parent=0 // pred_check_branch
    %286 = sbr.rel (0) target = $region29
  $region28: #{actor_forward.1} parent=0 // pred_region
    _
  $region29: #{actor_forward.1} parent=0 // pred_fallthru
    _

</llo_original>
